<compile_context>
chip_gen: v7x
topology: tpu7x:2x2x1
jax: 0.10.0
libtpu: 0.0.40
codegen_flags: <defaults>
</compile_context>

<pallas_src>
import functools

import jax
import jax.numpy as jnp
import numpy as np
from jax.experimental import pallas as pl
from jax.experimental.pallas import tpu as pltpu


def _round_up(x, m):
    return ((x + m - 1) // m) * m


def _cb_loss_kernel(logits_ref, labels_ref, w_ref, out_ref, *,
                    n_rows, tile_rows, tiles_per_chunk, gamma, use_focal):
    """Streams (TN, C) logit tiles and accumulates the sum of per-sample
    class-balanced (focal) loss into a resident (1, 128) block per parallel
    chunk (all 128 lanes carry the same running sum; wrapper reads lane 0)."""
    p = pl.program_id(0)          # parallel chunk (megacore axis on v7x)
    k = pl.program_id(1)          # reduction step within the chunk

    @pl.when(k == 0)
    def _():
        out_ref[...] = jnp.zeros_like(out_ref)

    logits = logits_ref[...].astype(jnp.float32)     # (TN, C) f32 math
    labels = labels_ref[...]                         # (TN, 1) int32
    w_row = w_ref[...]                               # (1, C) f32

    # Row validity: handles the partial last tile and the over-allocated
    # (clamped index_map) tail tile without any wrapper-side batch padding.
    tile_id = p * tiles_per_chunk + k
    row_ids = tile_id * tile_rows + jax.lax.broadcasted_iota(
        jnp.int32, (logits.shape[0], 1), 0)
    row_valid = row_ids < n_rows                     # (TN, 1) bool

    # Numerically stable log-sum-exp over the class (lane) axis.
    m = jnp.max(logits, axis=1, keepdims=True)       # (TN, 1)
    z = logits - m                                   # (TN, C)
    lse = jnp.log(jnp.sum(jnp.exp(z), axis=1, keepdims=True))

    # In-kernel gathers via (class == label) mask: z[label] and weights[label].
    col = jax.lax.broadcasted_iota(jnp.int32, z.shape, 1)
    sel = col == labels                              # (TN, C)
    z_lab = jnp.sum(jnp.where(sel, z, 0.0), axis=1, keepdims=True)
    w_i = jnp.sum(jnp.where(sel, w_row, 0.0), axis=1, keepdims=True)

    cb = w_i * (lse - z_lab)                         # weighted CE per sample

    if use_focal:
        pt = jnp.exp(-cb)
        omp = 1.0 - pt
        g = float(gamma)
        if g == int(g) and 1 <= int(g) <= 4:
            fw = omp
            for _ in range(int(g) - 1):              # VPU multiplies, no pow
                fw = fw * omp
        else:
            fw = omp ** g
        cb = fw * cb

    # Drop invalid rows with a select (NOT a multiply: out-of-range rows may
    # hold non-finite garbage and 0 * inf/NaN would poison the sum).
    cb = jnp.where(row_valid, cb, 0.0)

    out_ref[...] += jnp.sum(cb, axis=0, keepdims=True)   # (1,1) -> lane bcast


class ClassBalancedLoss:
    """JAX/Pallas re-implementation of the PyTorch ClassBalancedLoss module."""

    def __init__(self, samples_per_class, num_classes, beta=0.9999, gamma=2.0,
                 loss_type="focal"):
        self.num_classes = num_classes
        self.gamma = float(gamma)
        self.loss_type = loss_type
        effective_num = 1.0 - np.power(beta, samples_per_class)
        weights = (1.0 - beta) / np.array(effective_num)
        weights = weights / np.sum(weights) * num_classes
        self.weights = jnp.asarray(weights, dtype=jnp.float32)   # (C,)

    def __call__(self, logits, labels, *, block_rows=None):
        # PyTorch semantics: if labels is a score/one-hot matrix, argmax it.
        if labels.ndim > 1 and labels.shape[1] > 1:
            labels = jnp.argmax(labels, axis=1)
        labels = labels.reshape(-1).astype(jnp.int32)

        # Stream bf16 logits as-is (upcast in-kernel); anything else -> f32.
        if logits.dtype not in (np.dtype(jnp.float32), np.dtype(jnp.bfloat16)):
            logits = logits.astype(jnp.float32)

        N, C = logits.shape
        itemsize = logits.dtype.itemsize
        sublane = 16 if itemsize == 2 else 8           # packed bf16 tile (16,128)
        c_lanes = _round_up(C, 128)                    # VMEM lane-padded width

        # Batch tile: ~8 MiB of HBM-side logits per block (amortizes the
        # ~0.35us per-grid-step overhead), bounded so the double-buffered VMEM
        # footprint (logits + lane-padded label column + weights row) stays
        # <= ~32 MiB, which fits every generation including v7x (64 MiB VMEM).
        hbm_target = 8 * 1024 * 1024
        tn_hbm = (hbm_target // max(1, C * itemsize)) // sublane * sublane
        vmem_budget = 32 * 1024 * 1024
        per_row_vmem = 2 * c_lanes * itemsize + 2 * 128 * 4
        tn_vmem = ((vmem_budget - 2 * c_lanes * 4) // per_row_vmem
                   ) // sublane * sublane
        tn = max(sublane, min(tn_hbm, tn_vmem, 8192, _round_up(N, sublane)))
        if block_rows is not None:                     # testing / manual override
            tn = max(sublane, min(tn, _round_up(int(block_rows), sublane)))
        tn = int(tn)

        n_tiles = -(-N // tn)
        n_par = 2 if n_tiles >= 2 else 1               # use both v7x TensorCores
        k_steps = -(-n_tiles // n_par)

        def tile_map(p, k):
            # Clamp so the over-allocated tail tile (when n_par*k_steps >
            # n_tiles) maps to a valid block; its rows are masked in-kernel.
            return (jnp.minimum(p * k_steps + k, n_tiles - 1), 0)

        kernel = functools.partial(
            _cb_loss_kernel,
            n_rows=N, tile_rows=tn, tiles_per_chunk=k_steps,
            gamma=self.gamma, use_focal=(self.loss_type == "focal"))

        out = pl.pallas_call(
            kernel,
            out_shape=jax.ShapeDtypeStruct((1, n_par * 128), jnp.float32),
            grid=(n_par, k_steps),
            in_specs=[
                pl.BlockSpec((tn, C), tile_map),               # logits (no pad)
                pl.BlockSpec((tn, 1), tile_map),               # labels column
                pl.BlockSpec((1, C), lambda p, k: (0, 0)),     # resident weights
            ],
            out_specs=pl.BlockSpec((1, 128), lambda p, k: (0, p)),
            compiler_params=pltpu.CompilerParams(
                dimension_semantics=("parallel", "arbitrary"),
                vmem_limit_bytes=48 * 1024 * 1024),
        )(logits, labels.reshape(N, 1), self.weights.reshape(1, C))

        # Each chunk's 128 lanes hold that chunk's partial sum; read lane 0,
        # combine the chunks and apply the mean in the wrapper.
        chunk_sums = out.reshape(n_par, 128)[:, 0]
        return jnp.sum(chunk_sums) / float(N)


def _reference(logits, labels, weights, gamma, loss_type):
    """Pure-JAX reference mirroring F.cross_entropy(weight=w, reduction='none')."""
    if labels.ndim > 1 and labels.shape[1] > 1:
        labels = jnp.argmax(labels, axis=1)
    labels = labels.reshape(-1)
    logits = logits.astype(jnp.float32)
    logp = jax.nn.log_softmax(logits, axis=1)
    nll = -jnp.take_along_axis(logp, labels[:, None], axis=1)[:, 0]
    w_i = weights[labels]
    cb = w_i * nll
    if loss_type == "focal":
        pt = jnp.exp(-cb)
        cb = (1.0 - pt) ** gamma * cb
    return jnp.mean(cb)


if __name__ == "__main__":
    key = jax.random.PRNGKey(0)
    k1, k2, k3, k4, k5, k6 = jax.random.split(key, 6)

    # Test 1: f32 logits, C=40 (not a lane multiple), single tile, focal.
    C1, N1 = 40, 64
    spc1 = [10 + 3 * i for i in range(C1)]
    logits1 = jax.random.normal(k1, (N1, C1), dtype=jnp.float32)
    labels1 = jax.random.randint(k2, (N1,), 0, C1, dtype=jnp.int32)
    fn1 = ClassBalancedLoss(spc1, C1, beta=0.9999, gamma=2.0, loss_type="focal")
    out1 = jax.block_until_ready(fn1(logits1, labels1))
    ref1 = jax.block_until_ready(
        _reference(logits1, labels1, fn1.weights, fn1.gamma, fn1.loss_type))
    assert np.allclose(np.asarray(out1), np.asarray(ref1),
                       rtol=1e-4, atol=1e-5), (out1, ref1)

    # Test 2: bf16 logits, ragged batch (N=50), small C=10, one-hot labels
    # (exercises the argmax branch and row masking with tile rows > N).
    C2, N2 = 10, 50
    spc2 = list(range(10, 10 + C2))
    logits2 = jax.random.normal(
        k3, (N2, C2), dtype=jnp.float32).astype(jnp.bfloat16)
    labels2_idx = jax.random.randint(k4, (N2,), 0, C2, dtype=jnp.int32)
    labels2 = jax.nn.one_hot(labels2_idx, C2, dtype=jnp.float32)
    fn2 = ClassBalancedLoss(spc2, C2, beta=0.999, gamma=2.0, loss_type="focal")
    out2 = jax.block_until_ready(fn2(logits2, labels2))
    ref2 = jax.block_until_ready(
        _reference(logits2, labels2, fn2.weights, fn2.gamma, fn2.loss_type))
    assert np.allclose(np.asarray(out2), np.asarray(ref2),
                       rtol=1e-3, atol=1e-4), (out2, ref2)

    # Test 3: multi-tile accumulation + parallel chunk axis + clamped tail
    # tile (forced small tile: n_tiles=5, 2 chunks x 3 steps, one tile masked).
    C3, N3 = 24, 300
    spc3 = [5 + 2 * i for i in range(C3)]
    logits3 = jax.random.normal(k5, (N3, C3), dtype=jnp.float32)
    labels3 = jax.random.randint(k6, (N3,), 0, C3, dtype=jnp.int32)
    fn3 = ClassBalancedLoss(spc3, C3, beta=0.9999, gamma=2.0, loss_type="focal")
    out3 = jax.block_until_ready(fn3(logits3, labels3, block_rows=64))
    ref3 = jax.block_until_ready(
        _reference(logits3, labels3, fn3.weights, fn3.gamma, fn3.loss_type))
    assert np.allclose(np.asarray(out3), np.asarray(ref3),
                       rtol=1e-4, atol=1e-5), (out3, ref3)

    # Test 4: non-focal branch (plain weighted CE mean), reusing test-1 data.
    fn4 = ClassBalancedLoss(spc1, C1, beta=0.9999, gamma=2.0, loss_type="ce")
    out4 = jax.block_until_ready(fn4(logits1, labels1))
    ref4 = jax.block_until_ready(
        _reference(logits1, labels1, fn4.weights, fn4.gamma, fn4.loss_type))
    assert np.allclose(np.asarray(out4), np.asarray(ref4),
                       rtol=1e-4, atol=1e-5), (out4, ref4)

    print("KERNEL_OK")
</pallas_src>

<mosaic_0001>
module attributes {stable_mosaic.version = 11 : i64} {
  func.func @_cb_loss_kernel(%arg0: i32, %arg1: i32, %arg2: memref<64x40xf32, #tpu.memory_space<vmem>>, %arg3: memref<64x1xi32, #tpu.memory_space<vmem>>, %arg4: memref<1x40xf32, #tpu.memory_space<vmem>>, %arg5: memref<1x128xf32, #tpu.memory_space<vmem>>) attributes {dimension_semantics = [#tpu.dimension_semantics<parallel>, #tpu.dimension_semantics<arbitrary>], iteration_bounds = array<i64: 1, 1>, scalar_prefetch = 0 : i64, scratch_operands = 0 : i64, tpu.core_type = #tpu.core_type<tc>, window_params = [{transform_indices = @transform_0, window_bounds = array<i64: 64, 40>}, {transform_indices = @transform_1, window_bounds = array<i64: 64, 1>}, {pipeline_mode = #tpu.pipeline_mode<synchronous>, transform_indices = @transform_2, window_bounds = array<i64: 1, 40>}, {transform_indices = @transform_3, window_bounds = array<i64: 1, 128>}]} {
    %c0_i32 = arith.constant 0 : i32
    %0 = arith.cmpi eq, %arg1, %c0_i32 : i32
    %1 = arith.extui %0 : i1 to i32
    %c0_i32_0 = arith.constant 0 : i32
    %2 = arith.cmpi ne, %1, %c0_i32_0 : i32
    scf.if %2 {
      %cst_20 = arith.constant 0.000000e+00 : f32
      %52 = vector.broadcast %cst_20 : f32 to vector<1x128xf32>
      %c0_21 = arith.constant 0 : index
      %c0_22 = arith.constant 0 : index
      %53 = vector.load %arg5[%c0_21, %c0_22] : memref<1x128xf32, #tpu.memory_space<vmem>>, vector<1x128xf32>
      tpu.vector_store %arg5[%c0_21, %c0_22], %52 {strides = array<i32>} : memref<1x128xf32, #tpu.memory_space<vmem>>, vector<1x128xf32>,
    } else {
    }
    %c0 = arith.constant 0 : index
    %c0_1 = arith.constant 0 : index
    %3 = vector.load %arg2[%c0, %c0_1] : memref<64x40xf32, #tpu.memory_space<vmem>>, vector<64x40xf32>
    %c0_2 = arith.constant 0 : index
    %c0_3 = arith.constant 0 : index
    %4 = vector.load %arg3[%c0_2, %c0_3] : memref<64x1xi32, #tpu.memory_space<vmem>>, vector<64x1xi32>
    %c0_4 = arith.constant 0 : index
    %c0_5 = arith.constant 0 : index
    %5 = vector.load %arg4[%c0_4, %c0_5] : memref<1x40xf32, #tpu.memory_space<vmem>>, vector<1x40xf32>
    %c1_i32 = arith.constant 1 : i32
    %6 = arith.muli %arg0, %c1_i32 : i32
    %7 = arith.addi %6, %arg1 : i32
    %c64_i32 = arith.constant 64 : i32
    %8 = arith.muli %7, %c64_i32 : i32
    %9 = tpu.iota {dimensions = array<i32: 0>} : vector<64x1xi32>
    %10 = vector.broadcast %8 : i32 to vector<64x1xi32>
    %11 = arith.addi %10, %9 : vector<64x1xi32>
    %c64_i32_6 = arith.constant 64 : i32
    %12 = vector.broadcast %c64_i32_6 : i32 to vector<64x1xi32>
    %13 = arith.cmpi slt, %11, %12 : vector<64x1xi32>
    %cst = arith.constant dense<0xFF800000> : vector<64xf32>
    %14 = vector.multi_reduction <maximumf>, %3, %cst [1] : vector<64x40xf32> to vector<64xf32>
    %15 = vector.shape_cast %14 : vector<64xf32> to vector<64x1xf32>
    %16 = vector.broadcast %15 : vector<64x1xf32> to vector<64x40xf32>
    %17 = arith.subf %3, %16 : vector<64x40xf32>
    %18 = math.exp %17 : vector<64x40xf32>
    %cst_7 = arith.constant dense<0.000000e+00> : vector<64xf32>
    %19 = vector.multi_reduction <add>, %18, %cst_7 [1] : vector<64x40xf32> to vector<64xf32>
    %20 = vector.shape_cast %19 : vector<64xf32> to vector<64x1xf32>
    %21 = math.log %20 : vector<64x1xf32>
    %22 = tpu.iota {dimensions = array<i32: 1>} : vector<64x40xi32>
    %23 = vector.broadcast %4 : vector<64x1xi32> to vector<64x40xi32>
    %24 = arith.cmpi eq, %22, %23 : vector<64x40xi32>
    %cst_8 = arith.constant 0.000000e+00 : f32
    %25 = vector.broadcast %cst_8 : f32 to vector<64x40xf32>
    %26 = arith.select %24, %17, %25 : vector<64x40xi1>, vector<64x40xf32>
    %cst_9 = arith.constant dense<0.000000e+00> : vector<64xf32>
    %27 = vector.multi_reduction <add>, %26, %cst_9 [1] : vector<64x40xf32> to vector<64xf32>
    %28 = vector.shape_cast %27 : vector<64xf32> to vector<64x1xf32>
    %cst_10 = arith.constant 0.000000e+00 : f32
    %29 = vector.shape_cast %5 : vector<1x40xf32> to vector<1x40xf32>
    %30 = vector.broadcast %29 : vector<1x40xf32> to vector<64x40xf32>
    %31 = vector.broadcast %cst_10 : f32 to vector<64x40xf32>
    %32 = arith.select %24, %30, %31 : vector<64x40xi1>, vector<64x40xf32>
    %cst_11 = arith.constant dense<0.000000e+00> : vector<64xf32>
    %33 = vector.multi_reduction <add>, %32, %cst_11 [1] : vector<64x40xf32> to vector<64xf32>
    %34 = vector.shape_cast %33 : vector<64xf32> to vector<64x1xf32>
    %35 = arith.subf %21, %28 : vector<64x1xf32>
    %36 = arith.mulf %34, %35 : vector<64x1xf32>
    %cst_12 = arith.constant 0.000000e+00 : f32
    %37 = vector.broadcast %cst_12 : f32 to vector<64x1xf32>
    %38 = arith.subf %37, %36 : vector<64x1xf32>
    %39 = math.exp %38 : vector<64x1xf32>
    %cst_13 = arith.constant 1.000000e+00 : f32
    %40 = vector.broadcast %cst_13 : f32 to vector<64x1xf32>
    %41 = arith.subf %40, %39 : vector<64x1xf32>
    %42 = arith.mulf %41, %41 : vector<64x1xf32>
    %43 = arith.mulf %42, %36 : vector<64x1xf32>
    %cst_14 = arith.constant 0.000000e+00 : f32
    %44 = vector.broadcast %cst_14 : f32 to vector<64x1xf32>
    %45 = arith.select %13, %43, %44 : vector<64x1xi1>, vector<64x1xf32>
    %c0_15 = arith.constant 0 : index
    %c0_16 = arith.constant 0 : index
    %46 = vector.load %arg5[%c0_15, %c0_16] : memref<1x128xf32, #tpu.memory_space<vmem>>, vector<1x128xf32>
    %cst_17 = arith.constant dense<0.000000e+00> : vector<1xf32>
    %47 = vector.multi_reduction <add>, %45, %cst_17 [0] : vector<64x1xf32> to vector<1xf32>
    %48 = vector.shape_cast %47 : vector<1xf32> to vector<1x1xf32>
    %49 = vector.broadcast %48 : vector<1x1xf32> to vector<1x128xf32>
    %50 = arith.addf %46, %49 : vector<1x128xf32>
    %c0_18 = arith.constant 0 : index
    %c0_19 = arith.constant 0 : index
    %51 = vector.load %arg5[%c0_18, %c0_19] : memref<1x128xf32, #tpu.memory_space<vmem>>, vector<1x128xf32>
    tpu.vector_store %arg5[%c0_18, %c0_19], %50 {strides = array<i32>} : memref<1x128xf32, #tpu.memory_space<vmem>>, vector<1x128xf32>,
    return
  }
  func.func @transform_0(%arg0: i32, %arg1: i32) -> (i32, i32) {
    %c1_i32 = arith.constant 1 : i32
    %0 = arith.muli %arg0, %c1_i32 : i32
    %1 = arith.addi %0, %arg1 : i32
    %c0_i32 = arith.constant 0 : i32
    %2 = arith.minsi %1, %c0_i32 : i32
    %c0_i32_0 = arith.constant 0 : i32
    %c0_i32_1 = arith.constant 0 : i32
    return %2, %c0_i32_0 : i32, i32
  }
  func.func @transform_1(%arg0: i32, %arg1: i32) -> (i32, i32) {
    %c1_i32 = arith.constant 1 : i32
    %0 = arith.muli %arg0, %c1_i32 : i32
    %1 = arith.addi %0, %arg1 : i32
    %c0_i32 = arith.constant 0 : i32
    %2 = arith.minsi %1, %c0_i32 : i32
    %c0_i32_0 = arith.constant 0 : i32
    %c0_i32_1 = arith.constant 0 : i32
    return %2, %c0_i32_0 : i32, i32
  }
  func.func @transform_2(%arg0: i32, %arg1: i32) -> (i32, i32) {
    %c0_i32 = arith.constant 0 : i32
    %c0_i32_0 = arith.constant 0 : i32
    %c0_i32_1 = arith.constant 0 : i32
    return %c0_i32, %c0_i32_0 : i32, i32
  }
  func.func @transform_3(%arg0: i32, %arg1: i32) -> (i32, i32) {
    %c0_i32 = arith.constant 0 : i32
    %c0_i32_0 = arith.constant 0 : i32
    return %c0_i32, %arg0 : i32, i32
  }
}

</mosaic_0001>

<llo_original>
// kernel: tpu_custom_call.1
$region0: #{tpu_custom_call.1}
  #allocation0 [shape = 'u32[]', space=smem, size = 0x4, offset = 0x4, fixed_abs, tag = 'smem constant byte address 0x4 - core index']
  #allocation1 [shape = 'u32[144,128]{1,0:T(1,128)}', space=vmem, size = 0x12000, scoped, tag = 'internal scratch']
  %s0 = inlined_call_operand.vmem [shape: f32[64,40], index: 0, kind: input, shape index: {}]
  %s1 = inlined_call_operand.vmem [shape: s32[64,1], index: 1, kind: input, shape index: {}]
  %s2 = inlined_call_operand.vmem [shape: f32[1,40], index: 2, kind: input, shape index: {}]
  %s3 = inlined_call_operand.hbm [shape: f32[1,128], index: 3, kind: output, shape index: {}]
  %s4 = sld [smem:[#allocation0]]
  $region26: #{tpu_custom_call.1} parent=0
    _
  %s6 = ssub.s32 1, %s4
  %s7 = scalar_select 0, %s6, %s4
  $region1: #{tpu_custom_call.1} parent=0
    #allocation2 [shape = 'u8[512]{0}', space=vmem, size = 0x400, scoped, tag = 'output window, operand 0, single buffered']
    #allocation3 [shape = 's32[1]{0}', space=sflag, size = 0x4, scoped, tag = 'scoped memory for tpu_custom_call.1']
    %8 = vsyncpa [#allocation3], 0
    // Predicated region
    $region2: #{tpu_custom_call.1} parent=1 // pred_check
      _
    $region3: #{tpu_custom_call.1} parent=1 // pred_check_branch
      %10 = sbr.rel (0) target = $region5
    $region4: #{tpu_custom_call.1} parent=1 // pred_region
      %s11 = sadd.s32 0, 0
      %p12 = scmp.lt.s32.totalorder %s11, 0
      %s13 = scalar_select %p12, %s11, 0
      %s14 = smul.u32 8, %s13
      %p15 = scmp.lt.s32.totalorder %s14, 7
      %s16 = scalar_select %p15, %s14, 7
      %s17 = smul.addr %s16, 8
      %s18 = scalar_lea.vmem %s0, %s17
      %s19 = sadd.s32 0, 0
      %p20 = scmp.lt.s32.totalorder %s19, 0
      %s21 = scalar_select %p20, %s19, 0
      %s22 = smul.u32 8, %s21
    $region5: #{tpu_custom_call.1} parent=1 // pred_fallthru
      _
    // Predicated region
    $region6: #{tpu_custom_call.1} parent=1 // pred_check
      _
    $region7: #{tpu_custom_call.1} parent=1 // pred_check_branch
      %24 = sbr.rel (0) target = $region9
    $region8: #{tpu_custom_call.1} parent=1 // pred_region
      %s25 = sadd.s32 0, 0
      %p26 = scmp.lt.s32.totalorder %s25, 0
      %s27 = scalar_select %p26, %s25, 0
      %s28 = smul.u32 8, %s27
      %p29 = scmp.lt.s32.totalorder %s28, 7
      %s30 = scalar_select %p29, %s28, 7
      %s31 = smul.addr %s30, 8
      %s32 = scalar_lea.vmem %s1, %s31
      %s33 = sadd.s32 0, 0
      %p34 = scmp.lt.s32.totalorder %s33, 0
      %s35 = scalar_select %p34, %s33, 0
      %s36 = smul.u32 8, %s35
    $region9: #{tpu_custom_call.1} parent=1 // pred_fallthru
      _
    // Predicated region
    $region10: #{tpu_custom_call.1} parent=1 // pred_check
      _
    $region11: #{tpu_custom_call.1} parent=1 // pred_check_branch
      %38 = sbr.rel (0) target = $region13
    $region12: #{tpu_custom_call.1} parent=1 // pred_region
      _
    $region13: #{tpu_custom_call.1} parent=1 // pred_fallthru
      _
    %s39 = sadd.s32 0, 0
    %p40 = scmp.lt.s32.totalorder %s39, 0
    %s41 = scalar_select %p40, %s39, 0
    %s42 = smul.u32 8, %s41
    %p43 = scmp.lt.s32.totalorder %s42, 7
    %s44 = scalar_select %p43, %s42, 7
    %s45 = smul.addr %s44, 8
    %s46 = scalar_lea.vmem %s0, %s45
    %s47 = sadd.s32 0, 0
    %p48 = scmp.lt.s32.totalorder %s47, 0
    %s49 = scalar_select %p48, %s47, 0
    %s50 = smul.u32 8, %s49
    %p51 = scmp.lt.s32.totalorder %s50, 7
    %s52 = scalar_select %p51, %s50, 7
    %s53 = smul.addr %s52, 8
    %s54 = scalar_lea.vmem %s1, %s53
    %s55 = sadd.s32 0, 0
    %p56 = scmp.lt.s32.totalorder %s55, 0
    %s57 = scalar_select %p56, %s55, 0
    %s58 = smul.u32 8, %s57
    %p59 = scmp.lt.s32.totalorder %s58, 7
    %s60 = scalar_select %p59, %s58, 7
    %s61 = smul.addr %s60, 8
    %s62 = scalar_lea.vmem %s0, %s61
    %s63 = sadd.s32 0, 0
    %p64 = scmp.lt.s32.totalorder %s63, 0
    %s65 = scalar_select %p64, %s63, 0
    %s66 = smul.u32 8, %s65
    %s67 = sadd.s32 0, 0
    %p68 = scmp.lt.s32.totalorder %s67, 0
    %s69 = scalar_select %p68, %s67, 0
    %s70 = smul.u32 8, %s69
    %p71 = scmp.lt.s32.totalorder %s70, 7
    %s72 = scalar_select %p71, %s70, 7
    %s73 = smul.addr %s72, 8
    %s74 = scalar_lea.vmem %s1, %s73
    %s75 = sadd.s32 0, 0
    %p76 = scmp.lt.s32.totalorder %s75, 0
    %s77 = scalar_select %p76, %s75, 0
    %s78 = smul.u32 8, %s77
    %p79 = scmp.eq.s32.totalorder 0, 0
    // Predicated region
    $region14: #{tpu_custom_call.1} parent=1 // pred_check
      %p80 = pneg %p79
    $region15: #{tpu_custom_call.1} parent=1 // pred_check_branch
      %82 = sbr.rel (%p80) target = $region17
    $region16: #{tpu_custom_call.1} parent=1 // pred_region
      %83 = vst [vmem:[#allocation2] sm:$0x1] 0.0
    $region17: #{tpu_custom_call.1} parent=1 // pred_fallthru
      _
    %v84 = vld [vmem:[%s62] sm:$0xff]
    %v85 = vld [vmem:[%s62 + $0x8] sm:$0xff]
    %v86 = vld [vmem:[%s62 + $0x10] sm:$0xff]
    %v87 = vld [vmem:[%s62 + $0x18] sm:$0xff]
    %v88 = vld [vmem:[%s62 + $0x20] sm:$0xff]
    %v89 = vld [vmem:[%s62 + $0x28] sm:$0xff]
    %v90 = vld [vmem:[%s62 + $0x30] sm:$0xff]
    %v91 = vld [vmem:[%s62 + $0x38] sm:$0xff]
    %v92 = vld [vmem:[%s74] sm:$0xff]
    %v93 = vld [vmem:[%s74 + $0x8] sm:$0xff]
    %v94 = vld [vmem:[%s74 + $0x10] sm:$0xff]
    %v95 = vld [vmem:[%s74 + $0x18] sm:$0xff]
    %v96 = vld [vmem:[%s74 + $0x20] sm:$0xff]
    %v97 = vld [vmem:[%s74 + $0x28] sm:$0xff]
    %v98 = vld [vmem:[%s74 + $0x30] sm:$0xff]
    %v99 = vld [vmem:[%s74 + $0x38] sm:$0xff]
    %v100 = vld [vmem:[%s2] sm:$0x1]
    %s101 = sadd.s32 0, 0
    %s102 = smul.u32 %s101, 64
    %v103 = vlaneseq
    %v104 = vshrl.u32 %v103, 7
    %v105 = vadd.s32 %v104, 8
    %v106 = vadd.s32 %v104, 16
    %v107 = vadd.s32 %v104, 24
    %v108 = vadd.s32 %v104, 32
    %v109 = vadd.s32 %v104, 40
    %v110 = vadd.s32 %v104, 48
    %v111 = vadd.s32 %v104, 56
    %v112 = vstv %s102
    %v113 = vadd.s32 %v112, %v104
    %v114 = vadd.s32 %v112, %v105
    %v115 = vadd.s32 %v112, %v106
    %v116 = vadd.s32 %v112, %v107
    %v117 = vadd.s32 %v112, %v108
    %v118 = vadd.s32 %v112, %v109
    %v119 = vadd.s32 %v112, %v110
    %v120 = vadd.s32 %v112, %v111
    %vm121 = vcmp.lt.s32.totalorder %v113, 64
    %vm122 = vcmp.lt.s32.totalorder %v114, 64
    %vm123 = vcmp.lt.s32.totalorder %v115, 64
    %vm124 = vcmp.lt.s32.totalorder %v116, 64
    %vm125 = vcmp.lt.s32.totalorder %v117, 64
    %vm126 = vcmp.lt.s32.totalorder %v118, 64
    %vm127 = vcmp.lt.s32.totalorder %v119, 64
    %vm128 = vcmp.lt.s32.totalorder %v120, 64
    %vm129 = vcmask 326656
    %v130 = vsel %vm129, %v84, -inf
    %131 = vmax.xlane.f32.xlu0 %v130
    %v132 = vpop.xlane.xlu0 %131
    %v133 = vsel %vm129, %v85, -inf
    %134 = vmax.xlane.f32.xlu0 %v133
    %v135 = vpop.xlane.xlu0 %134
    %v136 = vsel %vm129, %v86, -inf
    %137 = vmax.xlane.f32.xlu0 %v136
    %v138 = vpop.xlane.xlu0 %137
    %v139 = vsel %vm129, %v87, -inf
    %140 = vmax.xlane.f32.xlu0 %v139
    %v141 = vpop.xlane.xlu0 %140
    %v142 = vsel %vm129, %v88, -inf
    %143 = vmax.xlane.f32.xlu0 %v142
    %v144 = vpop.xlane.xlu0 %143
    %v145 = vsel %vm129, %v89, -inf
    %146 = vmax.xlane.f32.xlu0 %v145
    %v147 = vpop.xlane.xlu0 %146
    %v148 = vsel %vm129, %v90, -inf
    %149 = vmax.xlane.f32.xlu0 %v148
    %v150 = vpop.xlane.xlu0 %149
    %v151 = vsel %vm129, %v91, -inf
    %152 = vmax.xlane.f32.xlu0 %v151
    %v153 = vpop.xlane.xlu0 %152
    %v154 = vsub.f32 %v84, %v132
    %v155 = vsub.f32 %v85, %v135
    %v156 = vsub.f32 %v86, %v138
    %v157 = vsub.f32 %v87, %v141
    %v158 = vsub.f32 %v88, %v144
    %v159 = vsub.f32 %v89, %v147
    %v160 = vsub.f32 %v90, %v150
    %v161 = vsub.f32 %v91, %v153
    %v162 = vmul.f32 %v154, 1.442695
    %v163 = vpow.pop %v162
    %v164 = vmul.f32 %v155, 1.442695
    %v165 = vpow.pop %v164
    %v166 = vmul.f32 %v156, 1.442695
    %v167 = vpow.pop %v166
    %v168 = vmul.f32 %v157, 1.442695
    %v169 = vpow.pop %v168
    %v170 = vmul.f32 %v158, 1.442695
    %v171 = vpow.pop %v170
    %v172 = vmul.f32 %v159, 1.442695
    %v173 = vpow.pop %v172
    %v174 = vmul.f32 %v160, 1.442695
    %v175 = vpow.pop %v174
    %v176 = vmul.f32 %v161, 1.442695
    %v177 = vpow.pop %v176
    %v178 = vsel %vm129, %v163, 0.0
    %179 = vadd.xlane.f32.xlu0 %v178
    %v180 = vpop.xlane.xlu0 %179
    %v181 = vsel %vm129, %v165, 0.0
    %182 = vadd.xlane.f32.xlu0 %v181
    %v183 = vpop.xlane.xlu0 %182
    %v184 = vsel %vm129, %v167, 0.0
    %185 = vadd.xlane.f32.xlu0 %v184
    %v186 = vpop.xlane.xlu0 %185
    %v187 = vsel %vm129, %v169, 0.0
    %188 = vadd.xlane.f32.xlu0 %v187
    %v189 = vpop.xlane.xlu0 %188
    %v190 = vsel %vm129, %v171, 0.0
    %191 = vadd.xlane.f32.xlu0 %v190
    %v192 = vpop.xlane.xlu0 %191
    %v193 = vsel %vm129, %v173, 0.0
    %194 = vadd.xlane.f32.xlu0 %v193
    %v195 = vpop.xlane.xlu0 %194
    %v196 = vsel %vm129, %v175, 0.0
    %197 = vadd.xlane.f32.xlu0 %v196
    %v198 = vpop.xlane.xlu0 %197
    %v199 = vsel %vm129, %v177, 0.0
    %200 = vadd.xlane.f32.xlu0 %v199
    %v201 = vpop.xlane.xlu0 %200
    %v202 = vlog2.pop %v180
    %v203 = vmul.f32 %v202, 0.6931472
    %v204 = vlog2.pop %v183
    %v205 = vmul.f32 %v204, 0.6931472
    %v206 = vlog2.pop %v186
    %v207 = vmul.f32 %v206, 0.6931472
    %v208 = vlog2.pop %v189
    %v209 = vmul.f32 %v208, 0.6931472
    %v210 = vlog2.pop %v192
    %v211 = vmul.f32 %v210, 0.6931472
    %v212 = vlog2.pop %v195
    %v213 = vmul.f32 %v212, 0.6931472
    %v214 = vlog2.pop %v198
    %v215 = vmul.f32 %v214, 0.6931472
    %v216 = vlog2.pop %v201
    %v217 = vmul.f32 %v216, 0.6931472
    %v218 = vlaneseq
    %v219 = vand.u32 %v218, 127
    %220 = vset.pattern.permute.xlu0 0
    %221 = vperm.xlu0 %220, %v92
    %v222 = vpop.permute.xlu0 %221
    %223 = vset.pattern.permute.xlu0 0
    %224 = vperm.xlu0 %223, %v93
    %v225 = vpop.permute.xlu0 %224
    %226 = vset.pattern.permute.xlu0 0
    %227 = vperm.xlu0 %226, %v94
    %v228 = vpop.permute.xlu0 %227
    %229 = vset.pattern.permute.xlu0 0
    %230 = vperm.xlu0 %229, %v95
    %v231 = vpop.permute.xlu0 %230
    %232 = vset.pattern.permute.xlu0 0
    %233 = vperm.xlu0 %232, %v96
    %v234 = vpop.permute.xlu0 %233
    %235 = vset.pattern.permute.xlu0 0
    %236 = vperm.xlu0 %235, %v97
    %v237 = vpop.permute.xlu0 %236
    %238 = vset.pattern.permute.xlu0 0
    %239 = vperm.xlu0 %238, %v98
    %v240 = vpop.permute.xlu0 %239
    %241 = vset.pattern.permute.xlu0 0
    %242 = vperm.xlu0 %241, %v99
    %v243 = vpop.permute.xlu0 %242
    %vm244 = vcmp.eq.s32.totalorder %v219, %v222
    %vm245 = vcmp.eq.s32.totalorder %v219, %v225
    %vm246 = vcmp.eq.s32.totalorder %v219, %v228
    %vm247 = vcmp.eq.s32.totalorder %v219, %v231
    %vm248 = vcmp.eq.s32.totalorder %v219, %v234
    %vm249 = vcmp.eq.s32.totalorder %v219, %v237
    %vm250 = vcmp.eq.s32.totalorder %v219, %v240
    %vm251 = vcmp.eq.s32.totalorder %v219, %v243
    %v252 = vsel %vm244, %v154, 0.0
    %v253 = vsel %vm245, %v155, 0.0
    %v254 = vsel %vm246, %v156, 0.0
    %v255 = vsel %vm247, %v157, 0.0
    %v256 = vsel %vm248, %v158, 0.0
    %v257 = vsel %vm249, %v159, 0.0
    %v258 = vsel %vm250, %v160, 0.0
    %v259 = vsel %vm251, %v161, 0.0
    %v260 = vsel %vm129, %v252, 0.0
    %261 = vadd.xlane.f32.xlu0 %v260
    %v262 = vpop.xlane.xlu0 %261
    %v263 = vsel %vm129, %v253, 0.0
    %264 = vadd.xlane.f32.xlu0 %v263
    %v265 = vpop.xlane.xlu0 %264
    %v266 = vsel %vm129, %v254, 0.0
    %267 = vadd.xlane.f32.xlu0 %v266
    %v268 = vpop.xlane.xlu0 %267
    %v269 = vsel %vm129, %v255, 0.0
    %270 = vadd.xlane.f32.xlu0 %v269
    %v271 = vpop.xlane.xlu0 %270
    %v272 = vsel %vm129, %v256, 0.0
    %273 = vadd.xlane.f32.xlu0 %v272
    %v274 = vpop.xlane.xlu0 %273
    %v275 = vsel %vm129, %v257, 0.0
    %276 = vadd.xlane.f32.xlu0 %v275
    %v277 = vpop.xlane.xlu0 %276
    %v278 = vsel %vm129, %v258, 0.0
    %279 = vadd.xlane.f32.xlu0 %v278
    %v280 = vpop.xlane.xlu0 %279
    %v281 = vsel %vm129, %v259, 0.0
    %282 = vadd.xlane.f32.xlu0 %v281
    %v283 = vpop.xlane.xlu0 %282
    %v285 = vlaneseq
    %v286 = vshrl.u32 %v285, 7
    %v287 = vsub.s32 0, %v286
    %v288 = vrot.slane %v100, %v287
    %v290 = vsel %vm244, %v288, 0.0
    %v291 = vsel %vm245, %v288, 0.0
    %v292 = vsel %vm246, %v288, 0.0
    %v293 = vsel %vm247, %v288, 0.0
    %v294 = vsel %vm248, %v288, 0.0
    %v295 = vsel %vm249, %v288, 0.0
    %v296 = vsel %vm250, %v288, 0.0
    %v297 = vsel %vm251, %v288, 0.0
    %v298 = vsel %vm129, %v290, 0.0
    %299 = vadd.xlane.f32.xlu0 %v298
    %v300 = vpop.xlane.xlu0 %299
    %v301 = vsel %vm129, %v291, 0.0
    %302 = vadd.xlane.f32.xlu0 %v301
    %v303 = vpop.xlane.xlu0 %302
    %v304 = vsel %vm129, %v292, 0.0
    %305 = vadd.xlane.f32.xlu0 %v304
    %v306 = vpop.xlane.xlu0 %305
    %v307 = vsel %vm129, %v293, 0.0
    %308 = vadd.xlane.f32.xlu0 %v307
    %v309 = vpop.xlane.xlu0 %308
    %v310 = vsel %vm129, %v294, 0.0
    %311 = vadd.xlane.f32.xlu0 %v310
    %v312 = vpop.xlane.xlu0 %311
    %v313 = vsel %vm129, %v295, 0.0
    %314 = vadd.xlane.f32.xlu0 %v313
    %v315 = vpop.xlane.xlu0 %314
    %v316 = vsel %vm129, %v296, 0.0
    %317 = vadd.xlane.f32.xlu0 %v316
    %v318 = vpop.xlane.xlu0 %317
    %v319 = vsel %vm129, %v297, 0.0
    %320 = vadd.xlane.f32.xlu0 %v319
    %v321 = vpop.xlane.xlu0 %320
    %v322 = vsub.f32 %v203, %v262
    %v323 = vsub.f32 %v205, %v265
    %v324 = vsub.f32 %v207, %v268
    %v325 = vsub.f32 %v209, %v271
    %v326 = vsub.f32 %v211, %v274
    %v327 = vsub.f32 %v213, %v277
    %v328 = vsub.f32 %v215, %v280
    %v329 = vsub.f32 %v217, %v283
    %v330 = vmul.f32 %v300, %v322
    %v331 = vmul.f32 %v303, %v323
    %v332 = vmul.f32 %v306, %v324
    %v333 = vmul.f32 %v309, %v325
    %v334 = vmul.f32 %v312, %v326
    %v335 = vmul.f32 %v315, %v327
    %v336 = vmul.f32 %v318, %v328
    %v337 = vmul.f32 %v321, %v329
    %v338 = vsub.f32 0.0, %v330
    %v339 = vsub.f32 0.0, %v331
    %v340 = vsub.f32 0.0, %v332
    %v341 = vsub.f32 0.0, %v333
    %v342 = vsub.f32 0.0, %v334
    %v343 = vsub.f32 0.0, %v335
    %v344 = vsub.f32 0.0, %v336
    %v345 = vsub.f32 0.0, %v337
    %v346 = vmul.f32 %v338, 1.442695
    %v347 = vpow.pop %v346
    %v348 = vmul.f32 %v339, 1.442695
    %v349 = vpow.pop %v348
    %v350 = vmul.f32 %v340, 1.442695
    %v351 = vpow.pop %v350
    %v352 = vmul.f32 %v341, 1.442695
    %v353 = vpow.pop %v352
    %v354 = vmul.f32 %v342, 1.442695
    %v355 = vpow.pop %v354
    %v356 = vmul.f32 %v343, 1.442695
    %v357 = vpow.pop %v356
    %v358 = vmul.f32 %v344, 1.442695
    %v359 = vpow.pop %v358
    %v360 = vmul.f32 %v345, 1.442695
    %v361 = vpow.pop %v360
    %v362 = vsub.f32 1.0, %v347
    %v363 = vsub.f32 1.0, %v349
    %v364 = vsub.f32 1.0, %v351
    %v365 = vsub.f32 1.0, %v353
    %v366 = vsub.f32 1.0, %v355
    %v367 = vsub.f32 1.0, %v357
    %v368 = vsub.f32 1.0, %v359
    %v369 = vsub.f32 1.0, %v361
    %v370 = vmul.f32 %v362, %v362
    %v371 = vmul.f32 %v363, %v363
    %v372 = vmul.f32 %v364, %v364
    %v373 = vmul.f32 %v365, %v365
    %v374 = vmul.f32 %v366, %v366
    %v375 = vmul.f32 %v367, %v367
    %v376 = vmul.f32 %v368, %v368
    %v377 = vmul.f32 %v369, %v369
    %v378 = vmul.f32 %v370, %v330
    %v379 = vmul.f32 %v371, %v331
    %v380 = vmul.f32 %v372, %v332
    %v381 = vmul.f32 %v373, %v333
    %v382 = vmul.f32 %v374, %v334
    %v383 = vmul.f32 %v375, %v335
    %v384 = vmul.f32 %v376, %v336
    %v385 = vmul.f32 %v377, %v337
    %v386 = vsel %vm121, %v378, 0.0
    %v387 = vsel %vm122, %v379, 0.0
    %v388 = vsel %vm123, %v380, 0.0
    %v389 = vsel %vm124, %v381, 0.0
    %v390 = vsel %vm125, %v382, 0.0
    %v391 = vsel %vm126, %v383, 0.0
    %v392 = vsel %vm127, %v384, 0.0
    %v393 = vsel %vm128, %v385, 0.0
    %v394 = vld [vmem:[#allocation2] sm:$0x1]
    %v395 = vadd.f32 %v386, %v387
    %v396 = vadd.f32 %v395, %v388
    %v397 = vadd.f32 %v396, %v389
    %v398 = vadd.f32 %v397, %v390
    %v399 = vadd.f32 %v398, %v391
    %v400 = vadd.f32 %v399, %v392
    %v401 = vadd.f32 %v400, %v393
    %v402 = vrot.slane %v401, 4
    %v403 = vadd.f32 %v401, %v402
    %v404 = vrot.slane %v403, 2
    %v405 = vadd.f32 %v403, %v404
    %v406 = vrot.slane %v405, 1
    %v407 = vadd.f32 %v405, %v406
    %v408 = vadd.f32 %v394, %v407
    %409 = vst [vmem:[#allocation2] sm:$0x1] %v408
    // Predicated region
    $region18: #{tpu_custom_call.1} parent=1 // pred_check
      _
    $region19: #{tpu_custom_call.1} parent=1 // pred_check_branch
      %411 = sbr.rel (0) target = $region21
    $region20: #{tpu_custom_call.1} parent=1 // pred_region
      %s413 = ssub.s32 16, 16
      %414 = vsyncadd [#allocation3], %s413
      %s416 = sshll.u32 [#allocation2], 4
      %s417 = int_to_ptr.vmem [resolvable:$true] %s416
      %419 = dma.vmem_to_hbm [thread:$0]  %s417, 16, %s3, [#allocation3]
    $region21: #{tpu_custom_call.1} parent=1 // pred_fallthru
      _
    // Predicated region
    $region22: #{tpu_custom_call.1} parent=1 // pred_check
      _
    $region23: #{tpu_custom_call.1} parent=1 // pred_check_branch
      %421 = sbr.rel (0) target = $region25
    $region24: #{tpu_custom_call.1} parent=1 // pred_region
      %422 = dma.done [#allocation3], 16
    $region25: #{tpu_custom_call.1} parent=1 // pred_fallthru
      _
    %423 = vsyncpa [#allocation3], 1

</llo_original>
